<compile_context>
chip_gen: v7x
topology: tpu7x:2x2x1
jax: 0.10.0
libtpu: 0.0.40
codegen_flags: <defaults>
</compile_context>

<pallas_src>
import functools

import jax
import jax.numpy as jnp
from jax.experimental import pallas as pl
from jax.experimental.pallas import tpu as pltpu

PI = 3.1415926  # deliberately low precision to match the PyTorch module; do not "fix"
_DEG2RAD = 2.0 * PI / 360.0


# ---------------------------------------------------------------------------
# Small shared helpers (angle / index construction, mirrors the PyTorch module)
# ---------------------------------------------------------------------------
def _build_idx_t(S, M, K, is_trick):
    """Per-time-sample CFO index (length T = (S+1)*(M+K)), matching the module."""
    if is_trick:
        return jnp.tile(jnp.arange(-K, M, dtype=jnp.float32), S + 1)
    return jnp.arange(0, (S + 1) * (M + K), dtype=jnp.float32)


def _build_angs(N, ang, is_random, key):
    if is_random:
        if key is None:
            raise ValueError("is_random=True requires an explicit PRNG key")
        return jax.random.uniform(key, (N,), dtype=jnp.float32) * (2.0 * ang) - ang
    return jnp.full((N,), ang, dtype=jnp.float32)


# ---------------------------------------------------------------------------
# Fused (interleaved-lane) kernels
# ---------------------------------------------------------------------------
def _pair_swap(x, jnp_roll):
    """Swap adjacent (re, im) lane pairs: out[..., 2t] = x[..., 2t+1], and
    out[..., 2t+1] = x[..., 2t].  The lane dim of x is an even multiple of
    128, so the circular rolls never feed a wrapped value into a selected
    lane.  `jnp_roll` encodes the probed roll direction convention."""
    L = x.shape[-1]
    axis = x.ndim - 1
    lane = jax.lax.broadcasted_iota(jnp.int32, x.shape, axis)
    is_even = (lane & 1) == 0
    nxt = pltpu.roll(x, (L - 1) if jnp_roll else 1, axis)   # x[..., l+1]
    prv = pltpu.roll(x, 1 if jnp_roll else (L - 1), axis)   # x[..., l-1]
    return jnp.where(is_even, nxt, prv)


def _cfo_fused_hoisted_kernel(c_ref, s_ref, x_ref, o_ref, *, jnp_roll):
    # c_ref / s_ref: (bn, 1, bl) cos / signed-sin coefficients.  x/o: (bn, C, bl).
    x = x_ref[...].astype(jnp.float32)
    out = c_ref[...].astype(jnp.float32) * x \
        + s_ref[...].astype(jnp.float32) * _pair_swap(x, jnp_roll)
    o_ref[...] = out.astype(o_ref.dtype)


def _cfo_fused_kernel(angs_ref, base_ref, x_ref, o_ref, *, jnp_roll):
    # angs_ref: (bn, 1, 1) per-batch angle (deg); base_ref: (1, 1, bl) index*deg2rad.
    x = x_ref[...].astype(jnp.float32)
    phase = angs_ref[...].astype(jnp.float32) * base_ref[...].astype(jnp.float32)
    c = jnp.cos(phase)                                       # (bn, 1, bl)
    s = jnp.sin(phase)
    lane = jax.lax.broadcasted_iota(jnp.int32, x.shape, 2)
    is_re = (lane & 1) == 0
    s = jnp.where(is_re, -s, s)                              # -sin at re lanes, +sin at im lanes
    o_ref[...] = (c * x + s * _pair_swap(x, jnp_roll)).astype(o_ref.dtype)


def _fused_blocks(N, C, T2, itemsize, target_bytes=1 << 20, lane_cap=2048):
    """Lane block = largest multiple of 128 <= T2 (capped); batch block sized
    so each data block is ~1 MiB (double-buffered in+out stays well inside the
    scoped-VMEM default on every chip generation)."""
    bl = min((T2 // 128) * 128, lane_cap)
    per_n = C * bl * itemsize
    bn = max(1, min(N, target_bytes // max(per_n, 1)))
    return bn, bl


def _add_cfo_fused(x, angs, *, S, M, K, is_trick, hoist_trig, jnp_roll):
    N, C = x.shape[0], x.shape[1]
    T = (S + 1) * (M + K)
    T2 = 2 * T
    x2 = x.reshape(N, C, T2)        # free reshape: re/im interleave stays on lanes

    bn, bl = _fused_blocks(N, C, T2, jnp.dtype(x.dtype).itemsize)
    grid = (pl.cdiv(N, bn), pl.cdiv(T2, bl))

    data_spec = pl.BlockSpec((bn, C, bl), lambda n, l: (n, 0, l))
    coef_spec = pl.BlockSpec((bn, 1, bl), lambda n, l: (n, 0, l))

    idx2 = jnp.repeat(_build_idx_t(S, M, K, is_trick), 2)    # (T2,), pair-duplicated

    if hoist_trig:
        # Tiny (N, 1, T2) coefficient arrays built in plain JAX; sign of sin is
        # folded in per lane (-sin at re lanes, +sin at im lanes).
        phase2 = (angs[:, None] * idx2[None, :]) / 360.0 * 2.0 * PI
        sign = jnp.tile(jnp.array([-1.0, 1.0], jnp.float32), T)
        c2 = jnp.cos(phase2).reshape(N, 1, T2)
        s2 = (jnp.sin(phase2) * sign[None, :]).reshape(N, 1, T2)
        kernel = functools.partial(_cfo_fused_hoisted_kernel, jnp_roll=jnp_roll)
        inputs = (c2, s2, x2)
        in_specs = [coef_spec, coef_spec, data_spec]
    else:
        base_t2 = (idx2 * _DEG2RAD).reshape(1, 1, T2)
        kernel = functools.partial(_cfo_fused_kernel, jnp_roll=jnp_roll)
        inputs = (angs.reshape(N, 1, 1), base_t2, x2)
        in_specs = [pl.BlockSpec((bn, 1, 1), lambda n, l: (n, 0, 0)),
                    pl.BlockSpec((1, 1, bl), lambda n, l: (0, 0, l)),
                    data_spec]

    out2 = pl.pallas_call(
        kernel,
        out_shape=jax.ShapeDtypeStruct((N, C, T2), x.dtype),
        grid_spec=pltpu.PrefetchScalarGridSpec(
            num_scalar_prefetch=0,
            grid=grid,
            in_specs=in_specs,
            out_specs=data_spec),
        compiler_params=pltpu.CompilerParams(
            dimension_semantics=("parallel", "parallel")),
    )(*inputs)
    return out2.reshape(x.shape)


# ---------------------------------------------------------------------------
# One-time capability / convention probe for pltpu.roll on the lane axis
# ---------------------------------------------------------------------------
_ROLL_PROBE = None  # None = not probed; else (supported: bool, jnp_convention: bool)


def _probe_roll():
    """Verify pltpu.roll lowers for our value structure (3-D, small second-minor,
    128-aligned lane dim) and determine its direction convention."""
    global _ROLL_PROBE
    if _ROLL_PROBE is not None:
        return _ROLL_PROBE
    try:
        def k(x_ref, o_ref):
            o_ref[...] = pltpu.roll(x_ref[...], 1, 2)

        xp = jnp.arange(4 * 2 * 256, dtype=jnp.float32).reshape(4, 2, 256)
        r = jax.block_until_ready(
            pl.pallas_call(k, out_shape=jax.ShapeDtypeStruct(xp.shape, xp.dtype))(xp))
        if bool(jnp.array_equal(r, jnp.roll(xp, 1, axis=2))):
            _ROLL_PROBE = (True, True)    # roll(x, 1)[l] == x[l-1]  (jnp.roll convention)
        elif bool(jnp.array_equal(r, jnp.roll(xp, -1, axis=2))):
            _ROLL_PROBE = (True, False)   # roll(x, 1)[l] == x[l+1]
        else:
            _ROLL_PROBE = (False, True)
    except Exception:
        _ROLL_PROBE = (False, True)
    return _ROLL_PROBE


# ---------------------------------------------------------------------------
# Planar fallback (v1 structure, proven to compile and run)
# ---------------------------------------------------------------------------
def _cfo_planar_kernel(ang_ref, x_ref, o_ref):
    # ang_ref: (bn, 1, T) phase in "degrees * index"; x_ref/o_ref: (bn, 2, C, T)
    phase = ang_ref[...].astype(jnp.float32) * _DEG2RAD
    c = jnp.cos(phase)[:, :, None, :]            # (bn, 1, 1, T)
    s = jnp.sin(phase)[:, :, None, :]
    x = x_ref[...].astype(jnp.float32)           # (bn, 2, C, T)
    re, im = x[:, 0:1], x[:, 1:2]                # (bn, 1, C, T)
    reo = c * re - s * im
    imo = c * im + s * re
    o_ref[...] = jnp.concatenate([reo, imo], axis=1).astype(o_ref.dtype)


def _pick_bn(N, per_n_block_bytes, target_bytes=2 << 20, min_steps=2):
    """Largest divisor of N with block <= ~target_bytes and >= min_steps grid steps."""
    cap = max(1, target_bytes // max(per_n_block_bytes, 1))
    if N >= min_steps:
        cap = min(cap, N // min_steps)
    cap = max(1, min(cap, N))
    bn = 1
    for d in range(1, cap + 1):
        if N % d == 0:
            bn = d
    return bn


def _add_cfo_planar(x, angs_all):
    N, C = x.shape[0], x.shape[1]
    T = angs_all.shape[-1]
    xt = jnp.transpose(x.reshape(N, C, T, 2), (0, 3, 1, 2))     # (N, 2, C, T)
    bn = _pick_bn(N, 2 * C * T * jnp.dtype(x.dtype).itemsize)
    data_spec = pl.BlockSpec((bn, 2, C, T), lambda n: (n, 0, 0, 0))
    ang_spec = pl.BlockSpec((bn, 1, T), lambda n: (n, 0, 0))
    out_t = pl.pallas_call(
        _cfo_planar_kernel,
        out_shape=jax.ShapeDtypeStruct((N, 2, C, T), x.dtype),
        grid_spec=pltpu.PrefetchScalarGridSpec(
            num_scalar_prefetch=0,
            grid=(N // bn,),
            in_specs=[ang_spec, data_spec],
            out_specs=data_spec),
        compiler_params=pltpu.CompilerParams(dimension_semantics=("parallel",)),
    )(angs_all, xt)
    return jnp.transpose(out_t, (0, 2, 3, 1)).reshape(x.shape)


# ---------------------------------------------------------------------------
# Public entry point
# ---------------------------------------------------------------------------
def add_cfo(x, *, S=4, M=64, K=16, ang=1.0, is_trick=True, is_random=False,
            key=None, impl="auto", hoist_trig=None):
    """Pallas implementation of Add_CFO.forward(input, isTrick, isRandom).

    impl:       "auto" (fused interleaved kernel with planar fallback) or
                "planar" (force the v1 transpose-based kernel).
    hoist_trig: None = auto (hoist for C < 4); else force hoisted / in-kernel trig.
    """
    global _ROLL_PROBE
    N, C = x.shape[0], x.shape[1]
    T = (S + 1) * (M + K)
    assert x.shape == (N, C, S + 1, M + K, 2), x.shape
    if hoist_trig is None:
        hoist_trig = C < 4

    angs = _build_angs(N, ang, is_random, key)               # (N,) f32

    if impl == "auto" and 2 * T >= 128:
        supported, jnp_roll = _probe_roll()
        if supported:
            try:
                out = _add_cfo_fused(x, angs, S=S, M=M, K=K, is_trick=is_trick,
                                     hoist_trig=hoist_trig, jnp_roll=jnp_roll)
                return jax.block_until_ready(out)
            except Exception:
                # Fused path did not lower on this Mosaic version; disable it
                # for the rest of the process and use the planar fallback.
                _ROLL_PROBE = (False, True)

    idx_t = _build_idx_t(S, M, K, is_trick)
    angs_all = (angs[:, None] * idx_t[None, :]).reshape(N, 1, T)
    return _add_cfo_planar(x, angs_all)


# ---------------------------------------------------------------------------
# Pure-JAX reference mirroring the PyTorch forward exactly
# ---------------------------------------------------------------------------
def add_cfo_ref(x, *, S=4, M=64, K=16, ang=1.0, is_trick=True, is_random=False,
                key=None):
    N, C = x.shape[0], x.shape[1]
    angs = _build_angs(N, ang, is_random, key)
    idx_t = _build_idx_t(S, M, K, is_trick)
    angs_all = (angs[:, None] * idx_t[None, :]).reshape(N, S + 1, M + K)
    real = jnp.cos(angs_all / 360.0 * 2.0 * PI)[:, None, :, :, None]
    imag = jnp.sin(angs_all / 360.0 * 2.0 * PI)[:, None, :, :, None]
    real_in = x[..., 0:1]
    imag_in = x[..., 1:2]
    real_out = real * real_in - imag * imag_in
    imag_out = real * imag_in + imag * real_in
    return jnp.concatenate((real_out, imag_out), axis=4)


if __name__ == "__main__":
    # Small shapes consistent with the module defaults: S=4, M=64, K=16.
    N, C, S, M, K = 4, 2, 4, 64, 16
    key = jax.random.PRNGKey(0)
    x = jax.random.normal(key, (N, C, S + 1, M + K, 2), dtype=jnp.float32)

    # 1) isTrick=True, isRandom=False -- fused interleaved kernel (hoisted trig).
    out = jax.block_until_ready(
        add_cfo(x, S=S, M=M, K=K, ang=1.0, is_trick=True, is_random=False))
    ref = add_cfo_ref(x, S=S, M=M, K=K, ang=1.0, is_trick=True, is_random=False)
    assert out.shape == (N, C, S + 1, M + K, 2)
    assert jnp.allclose(out, ref, atol=1e-5, rtol=1e-5), "mismatch (trick)"

    # 2) isTrick=False -- explicitly exercise the planar fallback kernel.
    out2 = jax.block_until_ready(
        add_cfo(x, S=S, M=M, K=K, ang=1.0, is_trick=False, is_random=False,
                impl="planar"))
    ref2 = add_cfo_ref(x, S=S, M=M, K=K, ang=1.0, is_trick=False, is_random=False)
    assert jnp.allclose(out2, ref2, atol=1e-4, rtol=1e-4), "mismatch (non-trick)"

    # 3) isRandom=True with an explicit key -- fused kernel with in-kernel trig.
    k2 = jax.random.PRNGKey(1)
    out3 = jax.block_until_ready(
        add_cfo(x, S=S, M=M, K=K, ang=1.0, is_trick=True, is_random=True, key=k2,
                hoist_trig=False))
    ref3 = add_cfo_ref(x, S=S, M=M, K=K, ang=1.0, is_trick=True, is_random=True,
                       key=k2)
    assert jnp.allclose(out3, ref3, atol=1e-5, rtol=1e-5), "mismatch (random)"

    print("KERNEL_OK")
</pallas_src>

<mosaic_0001>
module attributes {stable_mosaic.version = 11 : i64} {
  func.func @k(%arg0: memref<4x2x256xf32, #tpu.memory_space<vmem>>, %arg1: memref<4x2x256xf32, #tpu.memory_space<vmem>>) attributes {dimension_semantics = [], scalar_prefetch = 0 : i64, scratch_operands = 0 : i64, tpu.core_type = #tpu.core_type<tc>} {
    %c0 = arith.constant 0 : index
    %c0_0 = arith.constant 0 : index
    %c0_1 = arith.constant 0 : index
    %0 = vector.load %arg0[%c0, %c0_0, %c0_1] : memref<4x2x256xf32, #tpu.memory_space<vmem>>, vector<4x2x256xf32>
    %c1_i32 = arith.constant 1 : i32
    %1 = tpu.dynamic_rotate %0 by %c1_i32 dim 2 : vector<4x2x256xf32>, i32 -> vector<4x2x256xf32>
    %c0_2 = arith.constant 0 : index
    %c0_3 = arith.constant 0 : index
    %c0_4 = arith.constant 0 : index
    %2 = vector.load %arg1[%c0_2, %c0_3, %c0_4] : memref<4x2x256xf32, #tpu.memory_space<vmem>>, vector<4x2x256xf32>
    tpu.vector_store %arg1[%c0_2, %c0_3, %c0_4], %1 {strides = array<i32>} : memref<4x2x256xf32, #tpu.memory_space<vmem>>, vector<4x2x256xf32>,
    return
  }
}

module attributes {stable_mosaic.version = 11 : i64} {
  func.func @_cfo_planar_kernel(%arg0: i32, %arg1: memref<2x1x400xf32, #tpu.memory_space<vmem>>, %arg2: memref<2x2x2x400xf32, #tpu.memory_space<vmem>>, %arg3: memref<2x2x2x400xf32, #tpu.memory_space<vmem>>) attributes {dimension_semantics = [#tpu.dimension_semantics<parallel>], iteration_bounds = array<i64: 2>, scalar_prefetch = 0 : i64, scratch_operands = 0 : i64, tpu.core_type = #tpu.core_type<tc>, window_params = [{transform_indices = @transform_0, window_bounds = array<i64: 2, 1, 400>}, {transform_indices = @transform_1, window_bounds = array<i64: 2, 2, 2, 400>}, {transform_indices = @transform_2, window_bounds = array<i64: 2, 2, 2, 400>}]} {
    %c0 = arith.constant 0 : index
    %c0_0 = arith.constant 0 : index
    %c0_1 = arith.constant 0 : index
    %0 = vector.load %arg1[%c0, %c0_0, %c0_1] : memref<2x1x400xf32, #tpu.memory_space<vmem>>, vector<2x1x400xf32>
    %cst = arith.constant 0.0174532924 : f32
    %1 = vector.broadcast %cst : f32 to vector<2x1x400xf32>
    %2 = arith.mulf %0, %1 : vector<2x1x400xf32>
    %3 = math.cos %2 : vector<2x1x400xf32>
    %4 = vector.shape_cast %3 : vector<2x1x400xf32> to vector<2x1x1x400xf32>
    %5 = math.sin %2 : vector<2x1x400xf32>
    %6 = vector.shape_cast %5 : vector<2x1x400xf32> to vector<2x1x1x400xf32>
    %c0_2 = arith.constant 0 : index
    %c0_3 = arith.constant 0 : index
    %c0_4 = arith.constant 0 : index
    %c0_5 = arith.constant 0 : index
    %7 = vector.load %arg2[%c0_2, %c0_3, %c0_4, %c0_5] : memref<2x2x2x400xf32, #tpu.memory_space<vmem>>, vector<2x2x2x400xf32>
    %8 = vector.extract_strided_slice %7 {offsets = [0, 0, 0, 0], sizes = [2, 1, 2, 400], strides = [1, 1, 1, 1]} : vector<2x2x2x400xf32> to vector<2x1x2x400xf32>
    %9 = vector.extract_strided_slice %7 {offsets = [0, 1, 0, 0], sizes = [2, 1, 2, 400], strides = [1, 1, 1, 1]} : vector<2x2x2x400xf32> to vector<2x1x2x400xf32>
    %10 = vector.broadcast %4 : vector<2x1x1x400xf32> to vector<2x1x2x400xf32>
    %11 = arith.mulf %10, %8 : vector<2x1x2x400xf32>
    %12 = vector.broadcast %6 : vector<2x1x1x400xf32> to vector<2x1x2x400xf32>
    %13 = arith.mulf %12, %9 : vector<2x1x2x400xf32>
    %14 = arith.subf %11, %13 : vector<2x1x2x400xf32>
    %15 = vector.broadcast %4 : vector<2x1x1x400xf32> to vector<2x1x2x400xf32>
    %16 = arith.mulf %15, %9 : vector<2x1x2x400xf32>
    %17 = vector.broadcast %6 : vector<2x1x1x400xf32> to vector<2x1x2x400xf32>
    %18 = arith.mulf %17, %8 : vector<2x1x2x400xf32>
    %19 = arith.addf %16, %18 : vector<2x1x2x400xf32>
    %20 = tpu.concatenate %14, %19 in 1 : vector<2x1x2x400xf32>, vector<2x1x2x400xf32> -> vector<2x2x2x400xf32>
    %c0_6 = arith.constant 0 : index
    %c0_7 = arith.constant 0 : index
    %c0_8 = arith.constant 0 : index
    %c0_9 = arith.constant 0 : index
    %21 = vector.load %arg3[%c0_6, %c0_7, %c0_8, %c0_9] : memref<2x2x2x400xf32, #tpu.memory_space<vmem>>, vector<2x2x2x400xf32>
    tpu.vector_store %arg3[%c0_6, %c0_7, %c0_8, %c0_9], %20 {strides = array<i32>} : memref<2x2x2x400xf32, #tpu.memory_space<vmem>>, vector<2x2x2x400xf32>,
    return
  }
  func.func @transform_0(%arg0: i32) -> (i32, i32, i32) {
    %c0_i32 = arith.constant 0 : i32
    %c0_i32_0 = arith.constant 0 : i32
    %c0_i32_1 = arith.constant 0 : i32
    return %arg0, %c0_i32, %c0_i32_0 : i32, i32, i32
  }
  func.func @transform_1(%arg0: i32) -> (i32, i32, i32, i32) {
    %c0_i32 = arith.constant 0 : i32
    %c0_i32_0 = arith.constant 0 : i32
    %c0_i32_1 = arith.constant 0 : i32
    %c0_i32_2 = arith.constant 0 : i32
    return %arg0, %c0_i32, %c0_i32_0, %c0_i32_1 : i32, i32, i32, i32
  }
  func.func @transform_2(%arg0: i32) -> (i32, i32, i32, i32) {
    %c0_i32 = arith.constant 0 : i32
    %c0_i32_0 = arith.constant 0 : i32
    %c0_i32_1 = arith.constant 0 : i32
    %c0_i32_2 = arith.constant 0 : i32
    return %arg0, %c0_i32, %c0_i32_0, %c0_i32_1 : i32, i32, i32, i32
  }
}

</mosaic_0001>

<llo_original>
// kernel: tpu_custom_call.1
$region0: #{tpu_custom_call.1}
  #allocation0 [shape = 'u32[]', space=smem, size = 0x4, offset = 0x4, fixed_abs, tag = 'smem constant byte address 0x4 - core index']
  #allocation1 [shape = 'u32[144,128]{1,0:T(1,128)}', space=vmem, size = 0x12000, scoped, tag = 'internal scratch']
  %s0 = inlined_call_operand.hbm [shape: f32[4,2,256], index: 0, kind: input, shape index: {}]
  %s1 = inlined_call_operand.hbm [shape: f32[4,2,256], index: 1, kind: output, shape index: {}]
  %s2 = sld [smem:[#allocation0]]
  $region18: #{tpu_custom_call.1} parent=0
    _
  %s4 = ssub.s32 1, %s2
  %s5 = scalar_select 0, %s4, %s2
  $region1: #{tpu_custom_call.1} parent=0
    #allocation2 [shape = 'u8[8192]{0}', space=vmem, size = 0x2000, scoped, tag = 'input window, operand 0, single buffered']
    #allocation3 [shape = 's32[1]{0}', space=sflag, size = 0x4, scoped, tag = 'scoped memory for tpu_custom_call.1']
    #allocation4 [shape = 's32[1]{0}', space=sflag, size = 0x4, scoped, tag = 'scoped memory for tpu_custom_call.1']
    #allocation5 [shape = 'u8[8192]{0}', space=vmem, size = 0x2000, scoped, tag = 'output window, operand 0, single buffered']
    %6 = vsyncpa [#allocation3], 0
    %7 = vsyncpa [#allocation4], 0
    // Predicated region
    $region2: #{tpu_custom_call.1} parent=1 // pred_check
      _
    $region3: #{tpu_custom_call.1} parent=1 // pred_check_branch
      %9 = sbr.rel (0) target = $region5
    $region4: #{tpu_custom_call.1} parent=1 // pred_region
      %s11 = ssub.s32 256, 256
      %12 = vsyncadd [#allocation3], %s11
      %s13 = sshll.u32 [#allocation2], 4
      %s14 = int_to_ptr.vmem [resolvable:$true] %s13
      %19 = dma.hbm_to_vmem [thread:$0]  %s0, 256, %s14, [#allocation3], 64, 64, 4
    $region5: #{tpu_custom_call.1} parent=1 // pred_fallthru
      _
    // Predicated region
    $region6: #{tpu_custom_call.1} parent=1 // pred_check
      _
    $region7: #{tpu_custom_call.1} parent=1 // pred_check_branch
      %21 = sbr.rel (0) target = $region9
    $region8: #{tpu_custom_call.1} parent=1 // pred_region
      %22 = dma.done [#allocation3], 256
    $region9: #{tpu_custom_call.1} parent=1 // pred_fallthru
      _
    %v23 = vld [vmem:[#allocation2] sm:$0xf]
    %v24 = vld [vmem:[#allocation2 + $0x4] sm:$0xf]
    %v25 = vld [vmem:[#allocation2 + $0x8] sm:$0xf]
    %v26 = vld [vmem:[#allocation2 + $0xc] sm:$0xf]
    %v32 = vunpack.c.l.s4 1983009808
    %v33 = vunpack.c.0.s8 %v32
    %v34 = vlaneseq
    %v35 = vshrl.u32 %v34, 7
    %v36 = vsub.s32 %v33, %v35
    %v37 = vrot.slane %v23, %v36
    %v38 = vcombine.high %v37, %v37
    %v40 = vunpack.c.l.s4 1983009808
    %v41 = vunpack.c.0.s8 %v40
    %v42 = vlaneseq
    %v43 = vshrl.u32 %v42, 7
    %v44 = vsub.s32 %v41, %v43
    %v45 = vrot.slane %v24, %v44
    %v46 = vcombine.high %v45, %v45
    %v48 = vunpack.c.l.s4 1983009808
    %v49 = vunpack.c.0.s8 %v48
    %v50 = vlaneseq
    %v51 = vshrl.u32 %v50, 7
    %v52 = vsub.s32 %v49, %v51
    %v53 = vrot.slane %v25, %v52
    %v54 = vcombine.high %v53, %v53
    %v56 = vunpack.c.l.s4 1983009808
    %v57 = vunpack.c.0.s8 %v56
    %v58 = vlaneseq
    %v59 = vshrl.u32 %v58, 7
    %v60 = vsub.s32 %v57, %v59
    %v61 = vrot.slane %v26, %v60
    %v62 = vcombine.high %v61, %v61
    %71 = vrot.lane.b32.xlu0 %v37, 1
    %v72 = vpop.permute.xlu0 %71
    %73 = vrot.lane.b32.xlu0 %v45, 1
    %v74 = vpop.permute.xlu0 %73
    %75 = vrot.lane.b32.xlu0 %v53, 1
    %v76 = vpop.permute.xlu0 %75
    %77 = vrot.lane.b32.xlu0 %v61, 1
    %v78 = vpop.permute.xlu0 %77
    %79 = vrot.lane.b32.xlu0 %v38, 1
    %v80 = vpop.permute.xlu0 %79
    %81 = vrot.lane.b32.xlu0 %v46, 1
    %v82 = vpop.permute.xlu0 %81
    %83 = vrot.lane.b32.xlu0 %v54, 1
    %v84 = vpop.permute.xlu0 %83
    %85 = vrot.lane.b32.xlu0 %v62, 1
    %v86 = vpop.permute.xlu0 %85
    %v87 = vlaneseq
    %v88 = vand.u32 %v87, 127
    %vm89 = vcmp.lt.s32.totalorder %v88, 1
    %v90 = vsel %vm89, %v72, %v80
    %v91 = vsel %vm89, %v74, %v82
    %v92 = vsel %vm89, %v76, %v84
    %v93 = vsel %vm89, %v78, %v86
    %v94 = vsel %vm89, %v80, %v72
    %v95 = vsel %vm89, %v82, %v74
    %v96 = vsel %vm89, %v84, %v76
    %v97 = vsel %vm89, %v86, %v78
    %v106 = vcombine.low %v94, %v90
    %v108 = vunpack.c.l.s4 1983009808
    %v109 = vunpack.c.0.s8 %v108
    %v110 = vlaneseq
    %v111 = vshrl.u32 %v110, 7
    %v112 = vsub.s32 %v109, %v111
    %v113 = vrot.slane %v106, %v112
    %v114 = vcombine.low %v95, %v91
    %v116 = vunpack.c.l.s4 1983009808
    %v117 = vunpack.c.0.s8 %v116
    %v118 = vlaneseq
    %v119 = vshrl.u32 %v118, 7
    %v120 = vsub.s32 %v117, %v119
    %v121 = vrot.slane %v114, %v120
    %v122 = vcombine.low %v96, %v92
    %v124 = vunpack.c.l.s4 1983009808
    %v125 = vunpack.c.0.s8 %v124
    %v126 = vlaneseq
    %v127 = vshrl.u32 %v126, 7
    %v128 = vsub.s32 %v125, %v127
    %v129 = vrot.slane %v122, %v128
    %v130 = vcombine.low %v97, %v93
    %v132 = vunpack.c.l.s4 1983009808
    %v133 = vunpack.c.0.s8 %v132
    %v134 = vlaneseq
    %v135 = vshrl.u32 %v134, 7
    %v136 = vsub.s32 %v133, %v135
    %v137 = vrot.slane %v130, %v136
    %142 = vst [vmem:[#allocation5] sm:$0xf] %v113
    %143 = vst [vmem:[#allocation5 + $0x4] sm:$0xf] %v121
    %144 = vst [vmem:[#allocation5 + $0x8] sm:$0xf] %v129
    %145 = vst [vmem:[#allocation5 + $0xc] sm:$0xf] %v137
    // Predicated region
    $region10: #{tpu_custom_call.1} parent=1 // pred_check
      _
    $region11: #{tpu_custom_call.1} parent=1 // pred_check_branch
      %147 = sbr.rel (0) target = $region13
    $region12: #{tpu_custom_call.1} parent=1 // pred_region
      %s149 = ssub.s32 256, 256
      %150 = vsyncadd [#allocation4], %s149
      %s151 = sshll.u32 [#allocation5], 4
      %s152 = int_to_ptr.vmem [resolvable:$true] %s151
      %157 = dma.vmem_to_hbm [thread:$0]  %s152, 256, %s1, [#allocation4], 64, 64, 4
    $region13: #{tpu_custom_call.1} parent=1 // pred_fallthru
      _
    // Predicated region
    $region14: #{tpu_custom_call.1} parent=1 // pred_check
      _
    $region15: #{tpu_custom_call.1} parent=1 // pred_check_branch
      %159 = sbr.rel (0) target = $region17
    $region16: #{tpu_custom_call.1} parent=1 // pred_region
      %160 = dma.done [#allocation4], 256
    $region17: #{tpu_custom_call.1} parent=1 // pred_fallthru
      _
    %161 = vsyncpa [#allocation3], 1
    %162 = vsyncpa [#allocation4], 1

// kernel: tpu_custom_call.1
$region0: #{tpu_custom_call.1}
  #allocation0 [shape = 'u32[]', space=smem, size = 0x4, offset = 0x4, fixed_abs, tag = 'smem constant byte address 0x4 - core index']
  #allocation1 [shape = 'u32[144,128]{1,0:T(1,128)}', space=vmem, size = 0x12000, scoped, tag = 'internal scratch']
  %s0 = inlined_call_operand.hbm [shape: f32[4,1,400], index: 0, kind: input, shape index: {}]
  %s1 = inlined_call_operand.hbm [shape: f32[4,2,2,400], index: 1, kind: input, shape index: {}]
  %s2 = inlined_call_operand.hbm [shape: f32[4,2,2,400], index: 2, kind: output, shape index: {}]
  %s3 = sld [smem:[#allocation0]]
  $region49: #{tpu_custom_call.1} parent=0
    _
  %s5 = ssub.s32 1, %s3
  %s6 = scalar_select 0, %s5, %s3
  $region1: #{tpu_custom_call.1} parent=0
    #allocation2 [shape = 'u8[8192]{0}', space=vmem, size = 0x2000, scoped, tag = 'input window, operand 0']
    #allocation3 [shape = 's32[2]{0}', space=sflag, size = 0x8, scoped, tag = 'scoped memory for tpu_custom_call.1']
    #allocation4 [shape = 's32[2]{0}', space=sflag, size = 0x8, scoped, tag = 'scoped memory for tpu_custom_call.1']
    #allocation5 [shape = 'u8[32768]{0}', space=vmem, size = 0x8000, scoped, tag = 'input window, operand 1']
    #allocation6 [shape = 's32[2]{0}', space=sflag, size = 0x8, scoped, tag = 'scoped memory for tpu_custom_call.1']
    #allocation7 [shape = 'u8[32768]{0}', space=vmem, size = 0x8000, scoped, tag = 'output window, operand 0']
    %7 = vsyncpa [#allocation3], 0
    %s8 = scalar_lea.sflag [#allocation3], 1
    %9 = vsyncpa %s8, 0
    %10 = vsyncpa [#allocation6], 0
    %s11 = scalar_lea.sflag [#allocation6], 1
    %12 = vsyncpa %s11, 0
    %13 = vsyncpa [#allocation4], 0
    %s14 = scalar_lea.sflag [#allocation4], 1
    %15 = vsyncpa %s14, 0
    loop: start=0, step=1, limit=4
    $region2: #{tpu_custom_call.1} parent=1 // loop_pre_header
      _
    $region3: #{tpu_custom_call.1} parent=1 // loop_header
      %s17 = sphi 0, %s21
      %p18 = scmp.ge.s32.totalorder %s17, 4
      %s27 = sphi 0, %s29
      %s30 = sphi 0, %s27
      %s31 = sphi 0, %s30
      %s47 = sphi 0, %s31
      %s53 = sphi 0, %s55
      %s56 = sphi 0, %s53
      %s57 = sphi 0, %s56
      %s73 = sphi 0, %s57
      %s79 = sphi 0, %s81
      %s82 = sphi 0, %s79
      %s83 = sphi 0, %s82
      %s99 = sphi 0, %s83
    $region4: #{tpu_custom_call.1} parent=1 // loop_header_branch
      %20 = sbr.rel (%p18) target = $region8
    $region5: #{tpu_custom_call.1} parent=1 // loop_body
      %s22 = ssub.s32 %s17, 1
      %s23 = ssub.s32 %s17, 2
      %s24 = sadd.s32 %s17, 1
      %s25 = ssub.s32 %s17, %s24
      %p26 = scmp.eq.s32.totalorder %s25, 0
      %s28 = sadd.s32 %s27, 1
      %s29 = scalar_select %p26, %s27, %s28
      %p32 = pneg %p26
      %p33 = scmp.eq.s32.totalorder %s17, 1
      %p34 = por %p32, %p33
      %p35 = scmp.ne.s32.totalorder %s27, %s30
      %p36 = scmp.eq.s32.totalorder %s17, 0
      %p37 = por %p35, %p36
      %p38 = scmp.ne.s32.totalorder %s27, %s30
      %p39 = scmp.eq.s32.totalorder %s22, 1
      %p40 = por %p38, %p39
      %p41 = scmp.ne.s32.totalorder %s30, %s31
      %p42 = scmp.eq.s32.totalorder %s22, 0
      %p43 = por %p41, %p42
      %p44 = scmp.ne.s32.totalorder %s30, %s31
      %p45 = scmp.eq.s32.totalorder %s23, 1
      %p46 = por %p44, %p45
      %p48 = scmp.ne.s32.totalorder %s31, %s47
      %p49 = scmp.eq.s32.totalorder %s23, 0
      %p50 = por %p48, %p49
      %s51 = ssub.s32 %s17, %s24
      %p52 = scmp.eq.s32.totalorder %s51, 0
      %s54 = sadd.s32 %s53, 1
      %s55 = scalar_select %p52, %s53, %s54
      %p58 = pneg %p52
      %p59 = scmp.eq.s32.totalorder %s17, 1
      %p60 = por %p58, %p59
      %p61 = scmp.ne.s32.totalorder %s53, %s56
      %p62 = scmp.eq.s32.totalorder %s17, 0
      %p63 = por %p61, %p62
      %p64 = scmp.ne.s32.totalorder %s53, %s56
      %p65 = scmp.eq.s32.totalorder %s22, 1
      %p66 = por %p64, %p65
      %p67 = scmp.ne.s32.totalorder %s56, %s57
      %p68 = scmp.eq.s32.totalorder %s22, 0
      %p69 = por %p67, %p68
      %p70 = scmp.ne.s32.totalorder %s56, %s57
      %p71 = scmp.eq.s32.totalorder %s23, 1
      %p72 = por %p70, %p71
      %p74 = scmp.ne.s32.totalorder %s57, %s73
      %p75 = scmp.eq.s32.totalorder %s23, 0
      %p76 = por %p74, %p75
      %s77 = ssub.s32 %s17, %s24
      %p78 = scmp.eq.s32.totalorder %s77, 0
      %s80 = sadd.s32 %s79, 1
      %s81 = scalar_select %p78, %s79, %s80
      %p84 = pneg %p78
      %p85 = scmp.eq.s32.totalorder %s17, 1
      %p86 = por %p84, %p85
      %p87 = scmp.ne.s32.totalorder %s79, %s82
      %p88 = scmp.eq.s32.totalorder %s17, 0
      %p89 = por %p87, %p88
      %p90 = scmp.ne.s32.totalorder %s79, %s82
      %p91 = scmp.eq.s32.totalorder %s22, 1
      %p92 = por %p90, %p91
      %p93 = scmp.ne.s32.totalorder %s82, %s83
      %p94 = scmp.eq.s32.totalorder %s22, 0
      %p95 = por %p93, %p94
      %p96 = scmp.ne.s32.totalorder %s82, %s83
      %p97 = scmp.eq.s32.totalorder %s23, 1
      %p98 = por %p96, %p97
      %p100 = scmp.ne.s32.totalorder %s83, %s99
      %p101 = scmp.eq.s32.totalorder %s23, 0
      %p102 = por %p100, %p101
      %p103 = scmp.le.s32.totalorder 1, %s17
      %p104 = scmp.lt.s32.totalorder %s17, 3
      %p105 = pnand %p103, %p104
      %p106 = pneg %p105
      // Predicated region
      $region9: #{tpu_custom_call.1} parent=5 // pred_check
        _
      $region10: #{tpu_custom_call.1} parent=5 // pred_check_branch
        %108 = sbr.rel (%p105) target = $region12
      $region11: #{tpu_custom_call.1} parent=5 // pred_region
        %s109 = ssub.s32 %s17, 1
      $region12: #{tpu_custom_call.1} parent=5 // pred_fallthru
        _
      %p110 = scmp.lt.s32.totalorder %s17, 2
      // Predicated region
      $region13: #{tpu_custom_call.1} parent=5 // pred_check
        %p111 = pneg %p110
      $region14: #{tpu_custom_call.1} parent=5 // pred_check_branch
        %113 = sbr.rel (%p111) target = $region16
      $region15: #{tpu_custom_call.1} parent=5 // pred_region
        // Predicated region
        $region17: #{tpu_custom_call.1} parent=15 // pred_check
          %p114 = pneg %p37
        $region18: #{tpu_custom_call.1} parent=15 // pred_check_branch
          %116 = sbr.rel (%p114) target = $region20
        $region19: #{tpu_custom_call.1} parent=15 // pred_region
          %s117 = sand.u32 %s27, 1
          %s118 = scalar_lea.sflag [#allocation3], %s117
          %s119 = sand.u32 %s27, 1
          %s120 = smul.addr %s119, 8
          %s121 = scalar_lea.vmem [#allocation2], %s120
          %s122 = smul.u32 2, %s17
          %s124 = ssub.s32 128, 128
          %125 = vsyncadd %s118, %s124
          %s126 = smul.addr %s122, 4
          %s127 = smul.addr %s126, 16
          %s128 = scalar_lea.hbm %s0, %s127
          %s129 = sshll.u32 %s121, 4
          %s130 = int_to_ptr.vmem [resolvable:$true] %s129
          %135 = dma.hbm_to_vmem [thread:$0]  %s128, 128, %s130, %s118, 64, 64, 4
        $region20: #{tpu_custom_call.1} parent=15 // pred_fallthru
          _
        // Predicated region
        $region21: #{tpu_custom_call.1} parent=15 // pred_check
          %p136 = pneg %p63
        $region22: #{tpu_custom_call.1} parent=15 // pred_check_branch
          %138 = sbr.rel (%p136) target = $region24
        $region23: #{tpu_custom_call.1} parent=15 // pred_region
          %s139 = sand.u32 %s53, 1
          %s140 = scalar_lea.sflag [#allocation6], %s139
          %s141 = sand.u32 %s53, 1
          %s142 = smul.addr %s141, 32
          %s143 = scalar_lea.vmem [#allocation5], %s142
          %s144 = smul.u32 2, %s17
          %s146 = ssub.s32 512, 512
          %147 = vsyncadd %s140, %s146
          %s148 = smul.addr %s144, 8
          %s149 = smul.addr %s148, 32
          %s150 = scalar_lea.hbm %s1, %s149
          %s151 = sshll.u32 %s143, 4
          %s152 = int_to_ptr.vmem [resolvable:$true] %s151
          %157 = dma.hbm_to_vmem [thread:$0]  %s150, 512, %s152, %s140, 128, 128, 8
        $region24: #{tpu_custom_call.1} parent=15 // pred_fallthru
          _
      $region16: #{tpu_custom_call.1} parent=5 // pred_fallthru
        _
      %p158 = scmp.le.s32.totalorder 1, %s17
      %p159 = scmp.lt.s32.totalorder %s17, 3
      %p160 = pnand %p158, %p159
      %p161 = pneg %p160
      // Predicated region
      $region25: #{tpu_custom_call.1} parent=5 // pred_check
        _
      $region26: #{tpu_custom_call.1} parent=5 // pred_check_branch
        %163 = sbr.rel (%p160) target = $region28
      $region27: #{tpu_custom_call.1} parent=5 // pred_region
        %s164 = ssub.s32 %s17, 1
        %s165 = sand.u32 %s30, 1
        %s166 = scalar_lea.sflag [#allocation3], %s165
        %s167 = sand.u32 %s30, 1
        %s168 = smul.addr %s167, 8
        %s169 = scalar_lea.vmem [#allocation2], %s168
        // Predicated region
        $region29: #{tpu_custom_call.1} parent=27 // pred_check
          %p170 = pneg %p43
        $region30: #{tpu_custom_call.1} parent=27 // pred_check_branch
          %172 = sbr.rel (%p170) target = $region32
        $region31: #{tpu_custom_call.1} parent=27 // pred_region
          %173 = dma.done %s166, 128
        $region32: #{tpu_custom_call.1} parent=27 // pred_fallthru
          _
        %s174 = sand.u32 %s56, 1
        %s175 = scalar_lea.sflag [#allocation6], %s174
        %s176 = sand.u32 %s56, 1
        %s177 = smul.addr %s176, 32
        %s178 = scalar_lea.vmem [#allocation5], %s177
        // Predicated region
        $region33: #{tpu_custom_call.1} parent=27 // pred_check
          %p179 = pneg %p69
        $region34: #{tpu_custom_call.1} parent=27 // pred_check_branch
          %181 = sbr.rel (%p179) target = $region36
        $region35: #{tpu_custom_call.1} parent=27 // pred_region
          %182 = dma.done %s175, 512
        $region36: #{tpu_custom_call.1} parent=27 // pred_fallthru
          _
        %s183 = sand.u32 %s30, 1
        %s184 = scalar_lea.sflag [#allocation3], %s183
        %s185 = sand.u32 %s30, 1
        %s186 = smul.addr %s185, 8
        %s187 = scalar_lea.vmem [#allocation2], %s186
        %p188 = pneg %p43
        %p189 = pneg %p40
        %s190 = sand.u32 %s56, 1
        %s191 = scalar_lea.sflag [#allocation6], %s190
        %s192 = sand.u32 %s56, 1
        %s193 = smul.addr %s192, 32
        %s194 = scalar_lea.vmem [#allocation5], %s193
        %p195 = pneg %p69
        %p196 = pneg %p66
        %p197 = pneg %p95
        %p198 = pneg %p92
        %s199 = sand.u32 %s82, 1
        %s200 = scalar_lea.sflag [#allocation4], %s199
        %s201 = sand.u32 %s82, 1
        %s202 = smul.addr %s201, 32
        %s203 = scalar_lea.vmem [#allocation7], %s202
        %s204 = smul.u32 2, %s22
        %s205 = smul.u32 2, %s22
        %s206 = smul.u32 2, %s22
        %v207 = vld [vmem:[%s169] sm:$0xf]
        %v208 = vld [vmem:[%s169 + $0x4] sm:$0xf]
        %v209 = vmul.f32 %v207, 0.017453292
        %v210 = vmul.f32 %v208, 0.017453292
        %v211 = vand.u32 2147483647, %v209
        %vm212 = vcmp.le.f32.partialorder %v211, 0.7853982
        %vm213 = vcmp.lt.s32.totalorder %v209, 0
        %v214 = vand.u32 %v209, 2139095040
        %v215 = vshrl.u32 %v214, 23
        %v216 = vsub.s32 %v215, 127
        %v217 = vand.u32 2147483647, %v209
        %v218 = vand.u32 %v217, 8388607
        %v219 = vor.u32 %v218, 8388608
        %v220 = vsub.s32 0, %v219
        %v221 = vadd.s32 %v216, 1
        %vm222 = vcmp.gt.s32.totalorder %v221, 0
        %v223 = vsel %vm222, %v221, 0
        %v224 = vshrl.u32 %v223, 5
        %v225 = vand.u32 %v223, 31
        %v226 = vsub.s32 32, %v225
        %v227 = vshrl.u32 683565275, %v226
        %v228 = vshll.u32 683565275, %v225
        %v229 = vshrl.u32 2475754826, %v226
        %v230 = vor.u32 %v228, %v229
        %v231 = vshll.u32 2475754826, %v225
        %v232 = vshrl.u32 2131351028, %v226
        %v233 = vor.u32 %v231, %v232
        %v234 = vshll.u32 2131351028, %v225
        %v235 = vshrl.u32 2102212464, %v226
        %v236 = vor.u32 %v234, %v235
        %v237 = vshll.u32 2102212464, %v225
        %v238 = vshrl.u32 920167782, %v226
        %v239 = vor.u32 %v237, %v238
        %v240 = vshll.u32 920167782, %v225
        %v241 = vshrl.u32 1326507024, %v226
        %v242 = vor.u32 %v240, %v241
        %vm243 = vcmp.lt.s32.totalorder %v224, 1
        %vm244 = vcmp.lt.s32.totalorder %v224, 2
        %vm245 = vcmp.lt.s32.totalorder %v224, 3
        %vm246 = vcmp.lt.s32.totalorder %v224, 4
        %v247 = vsel %vm243, %v227, %v230
        %v248 = vsel %vm246, %v236, 2102212464
        %v249 = vsel %vm245, %v233, %v248
        %v250 = vsel %vm244, %v247, %v249
        %v251 = vsel %vm243, %v230, %v233
        %v252 = vsel %vm246, %v239, 920167782
        %v253 = vsel %vm245, %v236, %v252
        %v254 = vsel %vm244, %v251, %v253
        %v255 = vsel %vm243, %v233, %v236
        %v256 = vsel %vm246, %v242, 1326507024
        %v257 = vsel %vm245, %v239, %v256
        %v258 = vsel %vm244, %v255, %v257
        %v259 = vshll.u32 %v219, 8
        %v260 = vmul.u32.u64.compose %v259, %v258
        %v261 = vextract.low.u32 %v260
        %v262 = vextract.high.u32 %v260
        %v263 = vmul.u32.u64.compose %v259, %v254
        %v264 = vextract.low.u32 %v263
        %v265 = vextract.high.u32 %v263
        %v266 = vmul.u32 %v259, %v250
        %v267 = vadd.s32 %v262, %v264
        %vm268 = vc.u32 %v262, %v264
        %v269 = vadd.s32 %v265, 1
        %v270 = vsel %vm268, %v269, %v265
        %v271 = vadd.s32 %v266, %v270
        %v272 = vadd.s32 %v271, 536870912
        %v273 = vshrl.u32 %v272, 30
        %v274 = vshll.u32 %v273, 30
        %v275 = vsub.s32 %v271, %v274
        %vm276 = vcmp.lt.s32.totalorder %v275, 0
        %v277 = vsub.s32 0, %v275
        %v278 = vsel %vm276, %v277, %v275
        %v279 = vclz %v278
        %v280 = vsub.s32 %v279, 2
        %vm281 = vcmp.gt.s32.totalorder 0, %v280
        %v282 = vsel %vm281, 0, %v280
        %v283 = vsub.s32 32, %v282
        %v284 = vshll.u32 %v275, %v282
        %v285 = vshrl.u32 %v267, %v283
        %v286 = vor.u32 %v284, %v285
        %v287 = vsub.s32 4294967266, %v282
        %v288 = vadd.s32 %v287, 127
        %v289 = vshll.u32 %v288, 23
        %v290 = vor.u32 4788187, %v289
        %v291 = vand.u32 2147483647, %v290
        %v293 = vcvt.s32.f32 %v286
        %v294 = vmul.f32 %v293, %v291
        %v295 = vxor.u32 %v294, 2147483648
        %v296 = vsel %vm213, %v295, %v294
        %v297 = vsub.s32 4, %v273
        %v298 = vsel %vm213, %v297, %v273
        %v299 = vsel %vm212, %v209, %v296
        %v300 = vsel %vm212, 0, %v298
        %v301 = vcosq.f32.pop %v299
        %v302 = vsinq.f32.pop %v299
        %vm303 = vweird.f32 %v209
        %v304 = vand.u32 %v300, 3
        %vm305 = vcmp.lt.s32.totalorder %v304, 2
        %vm306 = vcmp.eq.s32.totalorder %v304, 0
        %v307 = vxor.u32 %v302, 2147483648
        %v308 = vsel %vm306, %v301, %v307
        %vm309 = vcmp.eq.s32.totalorder %v304, 2
        %v310 = vxor.u32 %v301, 2147483648
        %v311 = vsel %vm309, %v310, %v302
        %v312 = vsel %vm305, %v308, %v311
        %v313 = vsel %vm303, nan, %v312
        %v314 = vand.u32 2147483647, %v210
        %vm315 = vcmp.le.f32.partialorder %v314, 0.7853982
        %vm316 = vcmp.lt.s32.totalorder %v210, 0
        %v317 = vand.u32 %v210, 2139095040
        %v318 = vshrl.u32 %v317, 23
        %v319 = vsub.s32 %v318, 127
        %v320 = vand.u32 2147483647, %v210
        %v321 = vand.u32 %v320, 8388607
        %v322 = vor.u32 %v321, 8388608
        %v323 = vsub.s32 0, %v322
        %v324 = vadd.s32 %v319, 1
        %vm325 = vcmp.gt.s32.totalorder %v324, 0
        %v326 = vsel %vm325, %v324, 0
        %v327 = vshrl.u32 %v326, 5
        %v328 = vand.u32 %v326, 31
        %v329 = vsub.s32 32, %v328
        %v330 = vshrl.u32 683565275, %v329
        %v331 = vshll.u32 683565275, %v328
        %v332 = vshrl.u32 2475754826, %v329
        %v333 = vor.u32 %v331, %v332
        %v334 = vshll.u32 2475754826, %v328
        %v335 = vshrl.u32 2131351028, %v329
        %v336 = vor.u32 %v334, %v335
        %v337 = vshll.u32 2131351028, %v328
        %v338 = vshrl.u32 2102212464, %v329
        %v339 = vor.u32 %v337, %v338
        %v340 = vshll.u32 2102212464, %v328
        %v341 = vshrl.u32 920167782, %v329
        %v342 = vor.u32 %v340, %v341
        %v343 = vshll.u32 920167782, %v328
        %v344 = vshrl.u32 1326507024, %v329
        %v345 = vor.u32 %v343, %v344
        %vm346 = vcmp.lt.s32.totalorder %v327, 1
        %vm347 = vcmp.lt.s32.totalorder %v327, 2
        %vm348 = vcmp.lt.s32.totalorder %v327, 3
        %vm349 = vcmp.lt.s32.totalorder %v327, 4
        %v350 = vsel %vm346, %v330, %v333
        %v351 = vsel %vm349, %v339, 2102212464
        %v352 = vsel %vm348, %v336, %v351
        %v353 = vsel %vm347, %v350, %v352
        %v354 = vsel %vm346, %v333, %v336
        %v355 = vsel %vm349, %v342, 920167782
        %v356 = vsel %vm348, %v339, %v355
        %v357 = vsel %vm347, %v354, %v356
        %v358 = vsel %vm346, %v336, %v339
        %v359 = vsel %vm349, %v345, 1326507024
        %v360 = vsel %vm348, %v342, %v359
        %v361 = vsel %vm347, %v358, %v360
        %v362 = vshll.u32 %v322, 8
        %v363 = vmul.u32.u64.compose %v362, %v361
        %v364 = vextract.low.u32 %v363
        %v365 = vextract.high.u32 %v363
        %v366 = vmul.u32.u64.compose %v362, %v357
        %v367 = vextract.low.u32 %v366
        %v368 = vextract.high.u32 %v366
        %v369 = vmul.u32 %v362, %v353
        %v370 = vadd.s32 %v365, %v367
        %vm371 = vc.u32 %v365, %v367
        %v372 = vadd.s32 %v368, 1
        %v373 = vsel %vm371, %v372, %v368
        %v374 = vadd.s32 %v369, %v373
        %v375 = vadd.s32 %v374, 536870912
        %v376 = vshrl.u32 %v375, 30
        %v377 = vshll.u32 %v376, 30
        %v378 = vsub.s32 %v374, %v377
        %vm379 = vcmp.lt.s32.totalorder %v378, 0
        %v380 = vsub.s32 0, %v378
        %v381 = vsel %vm379, %v380, %v378
        %v382 = vclz %v381
        %v383 = vsub.s32 %v382, 2
        %vm384 = vcmp.gt.s32.totalorder 0, %v383
        %v385 = vsel %vm384, 0, %v383
        %v386 = vsub.s32 32, %v385
        %v387 = vshll.u32 %v378, %v385
        %v388 = vshrl.u32 %v370, %v386
        %v389 = vor.u32 %v387, %v388
        %v390 = vsub.s32 4294967266, %v385
        %v391 = vadd.s32 %v390, 127
        %v392 = vshll.u32 %v391, 23
        %v393 = vor.u32 4788187, %v392
        %v394 = vand.u32 2147483647, %v393
        %v396 = vcvt.s32.f32 %v389
        %v397 = vmul.f32 %v396, %v394
        %v398 = vxor.u32 %v397, 2147483648
        %v399 = vsel %vm316, %v398, %v397
        %v400 = vsub.s32 4, %v376
        %v401 = vsel %vm316, %v400, %v376
        %v402 = vsel %vm315, %v210, %v399
        %v403 = vsel %vm315, 0, %v401
        %v404 = vcosq.f32.pop %v402
        %v405 = vsinq.f32.pop %v402
        %vm406 = vweird.f32 %v210
        %v407 = vand.u32 %v403, 3
        %vm408 = vcmp.lt.s32.totalorder %v407, 2
        %vm409 = vcmp.eq.s32.totalorder %v407, 0
        %v410 = vxor.u32 %v405, 2147483648
        %v411 = vsel %vm409, %v404, %v410
        %vm412 = vcmp.eq.s32.totalorder %v407, 2
        %v413 = vxor.u32 %v404, 2147483648
        %v414 = vsel %vm412, %v413, %v405
        %v415 = vsel %vm408, %v411, %v414
        %v416 = vsel %vm406, nan, %v415
        %v417 = vand.u32 2147483647, %v209
        %vm418 = vcmp.le.f32.partialorder %v417, 0.7853982
        %vm419 = vcmp.lt.s32.totalorder %v209, 0
        %v420 = vand.u32 %v209, 2139095040
        %v421 = vshrl.u32 %v420, 23
        %v422 = vsub.s32 %v421, 127
        %v423 = vand.u32 2147483647, %v209
        %v424 = vand.u32 %v423, 8388607
        %v425 = vor.u32 %v424, 8388608
        %v426 = vsub.s32 0, %v425
        %v427 = vadd.s32 %v422, 1
        %vm428 = vcmp.gt.s32.totalorder %v427, 0
        %v429 = vsel %vm428, %v427, 0
        %v430 = vshrl.u32 %v429, 5
        %v431 = vand.u32 %v429, 31
        %v432 = vsub.s32 32, %v431
        %v433 = vshrl.u32 683565275, %v432
        %v434 = vshll.u32 683565275, %v431
        %v435 = vshrl.u32 2475754826, %v432
        %v436 = vor.u32 %v434, %v435
        %v437 = vshll.u32 2475754826, %v431
        %v438 = vshrl.u32 2131351028, %v432
        %v439 = vor.u32 %v437, %v438
        %v440 = vshll.u32 2131351028, %v431
        %v441 = vshrl.u32 2102212464, %v432
        %v442 = vor.u32 %v440, %v441
        %v443 = vshll.u32 2102212464, %v431
        %v444 = vshrl.u32 920167782, %v432
        %v445 = vor.u32 %v443, %v444
        %v446 = vshll.u32 920167782, %v431
        %v447 = vshrl.u32 1326507024, %v432
        %v448 = vor.u32 %v446, %v447
        %vm449 = vcmp.lt.s32.totalorder %v430, 1
        %vm450 = vcmp.lt.s32.totalorder %v430, 2
        %vm451 = vcmp.lt.s32.totalorder %v430, 3
        %vm452 = vcmp.lt.s32.totalorder %v430, 4
        %v453 = vsel %vm449, %v433, %v436
        %v454 = vsel %vm452, %v442, 2102212464
        %v455 = vsel %vm451, %v439, %v454
        %v456 = vsel %vm450, %v453, %v455
        %v457 = vsel %vm449, %v436, %v439
        %v458 = vsel %vm452, %v445, 920167782
        %v459 = vsel %vm451, %v442, %v458
        %v460 = vsel %vm450, %v457, %v459
        %v461 = vsel %vm449, %v439, %v442
        %v462 = vsel %vm452, %v448, 1326507024
        %v463 = vsel %vm451, %v445, %v462
        %v464 = vsel %vm450, %v461, %v463
        %v465 = vshll.u32 %v425, 8
        %v466 = vmul.u32.u64.compose %v465, %v464
        %v467 = vextract.low.u32 %v466
        %v468 = vextract.high.u32 %v466
        %v469 = vmul.u32.u64.compose %v465, %v460
        %v470 = vextract.low.u32 %v469
        %v471 = vextract.high.u32 %v469
        %v472 = vmul.u32 %v465, %v456
        %v473 = vadd.s32 %v468, %v470
        %vm474 = vc.u32 %v468, %v470
        %v475 = vadd.s32 %v471, 1
        %v476 = vsel %vm474, %v475, %v471
        %v477 = vadd.s32 %v472, %v476
        %v478 = vadd.s32 %v477, 536870912
        %v479 = vshrl.u32 %v478, 30
        %v480 = vshll.u32 %v479, 30
        %v481 = vsub.s32 %v477, %v480
        %vm482 = vcmp.lt.s32.totalorder %v481, 0
        %v483 = vsub.s32 0, %v481
        %v484 = vsel %vm482, %v483, %v481
        %v485 = vclz %v484
        %v486 = vsub.s32 %v485, 2
        %vm487 = vcmp.gt.s32.totalorder 0, %v486
        %v488 = vsel %vm487, 0, %v486
        %v489 = vsub.s32 32, %v488
        %v490 = vshll.u32 %v481, %v488
        %v491 = vshrl.u32 %v473, %v489
        %v492 = vor.u32 %v490, %v491
        %v493 = vsub.s32 4294967266, %v488
        %v494 = vadd.s32 %v493, 127
        %v495 = vshll.u32 %v494, 23
        %v496 = vor.u32 4788187, %v495
        %v497 = vand.u32 2147483647, %v496
        %v499 = vcvt.s32.f32 %v492
        %v500 = vmul.f32 %v499, %v497
        %v501 = vxor.u32 %v500, 2147483648
        %v502 = vsel %vm419, %v501, %v500
        %v503 = vsub.s32 4, %v479
        %v504 = vsel %vm419, %v503, %v479
        %v505 = vsel %vm418, %v209, %v502
        %v506 = vsel %vm418, 0, %v504
        %v507 = vcosq.f32.pop %v505
        %v508 = vsinq.f32.pop %v505
        %vm509 = vweird.f32 %v209
        %v510 = vadd.s32 %v506, 3
        %v511 = vand.u32 %v510, 3
        %vm512 = vcmp.lt.s32.totalorder %v511, 2
        %vm513 = vcmp.eq.s32.totalorder %v511, 0
        %v514 = vxor.u32 %v508, 2147483648
        %v515 = vsel %vm513, %v507, %v514
        %vm516 = vcmp.eq.s32.totalorder %v511, 2
        %v517 = vxor.u32 %v507, 2147483648
        %v518 = vsel %vm516, %v517, %v508
        %v519 = vsel %vm512, %v515, %v518
        %v520 = vsel %vm509, nan, %v519
        %v521 = vand.u32 2147483647, %v210
        %vm522 = vcmp.le.f32.partialorder %v521, 0.7853982
        %vm523 = vcmp.lt.s32.totalorder %v210, 0
        %v524 = vand.u32 %v210, 2139095040
        %v525 = vshrl.u32 %v524, 23
        %v526 = vsub.s32 %v525, 127
        %v527 = vand.u32 2147483647, %v210
        %v528 = vand.u32 %v527, 8388607
        %v529 = vor.u32 %v528, 8388608
        %v530 = vsub.s32 0, %v529
        %v531 = vadd.s32 %v526, 1
        %vm532 = vcmp.gt.s32.totalorder %v531, 0
        %v533 = vsel %vm532, %v531, 0
        %v534 = vshrl.u32 %v533, 5
        %v535 = vand.u32 %v533, 31
        %v536 = vsub.s32 32, %v535
        %v537 = vshrl.u32 683565275, %v536
        %v538 = vshll.u32 683565275, %v535
        %v539 = vshrl.u32 2475754826, %v536
        %v540 = vor.u32 %v538, %v539
        %v541 = vshll.u32 2475754826, %v535
        %v542 = vshrl.u32 2131351028, %v536
        %v543 = vor.u32 %v541, %v542
        %v544 = vshll.u32 2131351028, %v535
        %v545 = vshrl.u32 2102212464, %v536
        %v546 = vor.u32 %v544, %v545
        %v547 = vshll.u32 2102212464, %v535
        %v548 = vshrl.u32 920167782, %v536
        %v549 = vor.u32 %v547, %v548
        %v550 = vshll.u32 920167782, %v535
        %v551 = vshrl.u32 1326507024, %v536
        %v552 = vor.u32 %v550, %v551
        %vm553 = vcmp.lt.s32.totalorder %v534, 1
        %vm554 = vcmp.lt.s32.totalorder %v534, 2
        %vm555 = vcmp.lt.s32.totalorder %v534, 3
        %vm556 = vcmp.lt.s32.totalorder %v534, 4
        %v557 = vsel %vm553, %v537, %v540
        %v558 = vsel %vm556, %v546, 2102212464
        %v559 = vsel %vm555, %v543, %v558
        %v560 = vsel %vm554, %v557, %v559
        %v561 = vsel %vm553, %v540, %v543
        %v562 = vsel %vm556, %v549, 920167782
        %v563 = vsel %vm555, %v546, %v562
        %v564 = vsel %vm554, %v561, %v563
        %v565 = vsel %vm553, %v543, %v546
        %v566 = vsel %vm556, %v552, 1326507024
        %v567 = vsel %vm555, %v549, %v566
        %v568 = vsel %vm554, %v565, %v567
        %v569 = vshll.u32 %v529, 8
        %v570 = vmul.u32.u64.compose %v569, %v568
        %v571 = vextract.low.u32 %v570
        %v572 = vextract.high.u32 %v570
        %v573 = vmul.u32.u64.compose %v569, %v564
        %v574 = vextract.low.u32 %v573
        %v575 = vextract.high.u32 %v573
        %v576 = vmul.u32 %v569, %v560
        %v577 = vadd.s32 %v572, %v574
        %vm578 = vc.u32 %v572, %v574
        %v579 = vadd.s32 %v575, 1
        %v580 = vsel %vm578, %v579, %v575
        %v581 = vadd.s32 %v576, %v580
        %v582 = vadd.s32 %v581, 536870912
        %v583 = vshrl.u32 %v582, 30
        %v584 = vshll.u32 %v583, 30
        %v585 = vsub.s32 %v581, %v584
        %vm586 = vcmp.lt.s32.totalorder %v585, 0
        %v587 = vsub.s32 0, %v585
        %v588 = vsel %vm586, %v587, %v585
        %v589 = vclz %v588
        %v590 = vsub.s32 %v589, 2
        %vm591 = vcmp.gt.s32.totalorder 0, %v590
        %v592 = vsel %vm591, 0, %v590
        %v593 = vsub.s32 32, %v592
        %v594 = vshll.u32 %v585, %v592
        %v595 = vshrl.u32 %v577, %v593
        %v596 = vor.u32 %v594, %v595
        %v597 = vsub.s32 4294967266, %v592
        %v598 = vadd.s32 %v597, 127
        %v599 = vshll.u32 %v598, 23
        %v600 = vor.u32 4788187, %v599
        %v601 = vand.u32 2147483647, %v600
        %v603 = vcvt.s32.f32 %v596
        %v604 = vmul.f32 %v603, %v601
        %v605 = vxor.u32 %v604, 2147483648
        %v606 = vsel %vm523, %v605, %v604
        %v607 = vsub.s32 4, %v583
        %v608 = vsel %vm523, %v607, %v583
        %v609 = vsel %vm522, %v210, %v606
        %v610 = vsel %vm522, 0, %v608
        %v611 = vcosq.f32.pop %v609
        %v612 = vsinq.f32.pop %v609
        %vm613 = vweird.f32 %v210
        %v614 = vadd.s32 %v610, 3
        %v615 = vand.u32 %v614, 3
        %vm616 = vcmp.lt.s32.totalorder %v615, 2
        %vm617 = vcmp.eq.s32.totalorder %v615, 0
        %v618 = vxor.u32 %v612, 2147483648
        %v619 = vsel %vm617, %v611, %v618
        %vm620 = vcmp.eq.s32.totalorder %v615, 2
        %v621 = vxor.u32 %v611, 2147483648
        %v622 = vsel %vm620, %v621, %v612
        %v623 = vsel %vm616, %v619, %v622
        %v624 = vsel %vm613, nan, %v623
        %v625 = vld [vmem:[%s178] sm:$0xff]
        %v626 = vld [vmem:[%s178 + $0x8] sm:$0xff]
        %v627 = vld [vmem:[%s178 + $0x10] sm:$0xff]
        %v628 = vld [vmem:[%s178 + $0x18] sm:$0xff]
        %v631 = vlaneseq
        %v632 = vshrl.u32 %v631, 7
        %v633 = vsub.s32 0, %v632
        %v634 = vrot.slane %v313, %v633
        %v635 = vlaneseq
        %v636 = vshrl.u32 %v635, 7
        %v637 = vsub.s32 1, %v636
        %v638 = vrot.slane %v313, %v637
        %v639 = vlaneseq
        %v640 = vshrl.u32 %v639, 7
        %v641 = vsub.s32 2, %v640
        %v642 = vrot.slane %v313, %v641
        %v643 = vlaneseq
        %v644 = vshrl.u32 %v643, 7
        %v645 = vsub.s32 3, %v644
        %v646 = vrot.slane %v313, %v645
        %v647 = vlaneseq
        %v648 = vshrl.u32 %v647, 7
        %v649 = vsub.s32 0, %v648
        %v650 = vrot.slane %v416, %v649
        %v651 = vlaneseq
        %v652 = vshrl.u32 %v651, 7
        %v653 = vsub.s32 1, %v652
        %v654 = vrot.slane %v416, %v653
        %v655 = vlaneseq
        %v656 = vshrl.u32 %v655, 7
        %v657 = vsub.s32 2, %v656
        %v658 = vrot.slane %v416, %v657
        %v659 = vlaneseq
        %v660 = vshrl.u32 %v659, 7
        %v661 = vsub.s32 3, %v660
        %v662 = vrot.slane %v416, %v661
        %v673 = vcombine.high %v625, %v625
        %v675 = vunpack.c.l.s4 1983009808
        %v676 = vunpack.c.0.s8 %v675
        %v677 = vlaneseq
        %v678 = vshrl.u32 %v677, 7
        %v679 = vsub.s32 %v676, %v678
        %v680 = vrot.slane %v625, %v679
        %v682 = vunpack.c.l.s4 1983009808
        %v683 = vunpack.c.0.s8 %v682
        %v684 = vlaneseq
        %v685 = vshrl.u32 %v684, 7
        %v686 = vsub.s32 %v683, %v685
        %v687 = vrot.slane %v673, %v686
        %v688 = vcombine.high %v680, %v680
        %v689 = vcombine.high %v687, %v687
        %v690 = vcombine.high %v627, %v627
        %v692 = vunpack.c.l.s4 1983009808
        %v693 = vunpack.c.0.s8 %v692
        %v694 = vlaneseq
        %v695 = vshrl.u32 %v694, 7
        %v696 = vsub.s32 %v693, %v695
        %v697 = vrot.slane %v627, %v696
        %v699 = vunpack.c.l.s4 1983009808
        %v700 = vunpack.c.0.s8 %v699
        %v701 = vlaneseq
        %v702 = vshrl.u32 %v701, 7
        %v703 = vsub.s32 %v700, %v702
        %v704 = vrot.slane %v690, %v703
        %v705 = vcombine.high %v697, %v697
        %v706 = vcombine.high %v704, %v704
        %v715 = vmul.f32 %v634, %v680
        %v716 = vmul.f32 %v638, %v688
        %v717 = vmul.f32 %v642, %v687
        %v718 = vmul.f32 %v646, %v689
        %v719 = vmul.f32 %v650, %v697
        %v720 = vmul.f32 %v654, %v705
        %v721 = vmul.f32 %v658, %v704
        %v722 = vmul.f32 %v662, %v706
        %v725 = vlaneseq
        %v726 = vshrl.u32 %v725, 7
        %v727 = vsub.s32 0, %v726
        %v728 = vrot.slane %v520, %v727
        %v729 = vlaneseq
        %v730 = vshrl.u32 %v729, 7
        %v731 = vsub.s32 1, %v730
        %v732 = vrot.slane %v520, %v731
        %v733 = vlaneseq
        %v734 = vshrl.u32 %v733, 7
        %v735 = vsub.s32 2, %v734
        %v736 = vrot.slane %v520, %v735
        %v737 = vlaneseq
        %v738 = vshrl.u32 %v737, 7
        %v739 = vsub.s32 3, %v738
        %v740 = vrot.slane %v520, %v739
        %v741 = vlaneseq
        %v742 = vshrl.u32 %v741, 7
        %v743 = vsub.s32 0, %v742
        %v744 = vrot.slane %v624, %v743
        %v745 = vlaneseq
        %v746 = vshrl.u32 %v745, 7
        %v747 = vsub.s32 1, %v746
        %v748 = vrot.slane %v624, %v747
        %v749 = vlaneseq
        %v750 = vshrl.u32 %v749, 7
        %v751 = vsub.s32 2, %v750
        %v752 = vrot.slane %v624, %v751
        %v753 = vlaneseq
        %v754 = vshrl.u32 %v753, 7
        %v755 = vsub.s32 3, %v754
        %v756 = vrot.slane %v624, %v755
        %v767 = vcombine.high %v626, %v626
        %v769 = vunpack.c.l.s4 1983009808
        %v770 = vunpack.c.0.s8 %v769
        %v771 = vlaneseq
        %v772 = vshrl.u32 %v771, 7
        %v773 = vsub.s32 %v770, %v772
        %v774 = vrot.slane %v626, %v773
        %v776 = vunpack.c.l.s4 1983009808
        %v777 = vunpack.c.0.s8 %v776
        %v778 = vlaneseq
        %v779 = vshrl.u32 %v778, 7
        %v780 = vsub.s32 %v777, %v779
        %v781 = vrot.slane %v767, %v780
        %v782 = vcombine.high %v774, %v774
        %v783 = vcombine.high %v781, %v781
        %v784 = vcombine.high %v628, %v628
        %v786 = vunpack.c.l.s4 1983009808
        %v787 = vunpack.c.0.s8 %v786
        %v788 = vlaneseq
        %v789 = vshrl.u32 %v788, 7
        %v790 = vsub.s32 %v787, %v789
        %v791 = vrot.slane %v628, %v790
        %v793 = vunpack.c.l.s4 1983009808
        %v794 = vunpack.c.0.s8 %v793
        %v795 = vlaneseq
        %v796 = vshrl.u32 %v795, 7
        %v797 = vsub.s32 %v794, %v796
        %v798 = vrot.slane %v784, %v797
        %v799 = vcombine.high %v791, %v791
        %v800 = vcombine.high %v798, %v798
        %v809 = vmul.f32 %v728, %v774
        %v810 = vmul.f32 %v732, %v782
        %v811 = vmul.f32 %v736, %v781
        %v812 = vmul.f32 %v740, %v783
        %v813 = vmul.f32 %v744, %v791
        %v814 = vmul.f32 %v748, %v799
        %v815 = vmul.f32 %v752, %v798
        %v816 = vmul.f32 %v756, %v800
        %v817 = vsub.f32 %v715, %v809
        %v818 = vsub.f32 %v716, %v810
        %v819 = vsub.f32 %v717, %v811
        %v820 = vsub.f32 %v718, %v812
        %v821 = vsub.f32 %v719, %v813
        %v822 = vsub.f32 %v720, %v814
        %v823 = vsub.f32 %v721, %v815
        %v824 = vsub.f32 %v722, %v816
        %v825 = vmul.f32 %v634, %v774
        %v826 = vmul.f32 %v638, %v782
        %v827 = vmul.f32 %v642, %v781
        %v828 = vmul.f32 %v646, %v783
        %v829 = vmul.f32 %v650, %v791
        %v830 = vmul.f32 %v654, %v799
        %v831 = vmul.f32 %v658, %v798
        %v832 = vmul.f32 %v662, %v800
        %v833 = vmul.f32 %v728, %v680
        %v834 = vmul.f32 %v732, %v688
        %v835 = vmul.f32 %v736, %v687
        %v836 = vmul.f32 %v740, %v689
        %v837 = vmul.f32 %v744, %v697
        %v838 = vmul.f32 %v748, %v705
        %v839 = vmul.f32 %v752, %v704
        %v840 = vmul.f32 %v756, %v706
        %v841 = vadd.f32 %v825, %v833
        %v842 = vadd.f32 %v826, %v834
        %v843 = vadd.f32 %v827, %v835
        %v844 = vadd.f32 %v828, %v836
        %v845 = vadd.f32 %v829, %v837
        %v846 = vadd.f32 %v830, %v838
        %v847 = vadd.f32 %v831, %v839
        %v848 = vadd.f32 %v832, %v840
        %v865 = vcombine.low %v817, %v818
        %v866 = vcombine.low %v819, %v820
        %v868 = vunpack.c.l.s4 1983009808
        %v869 = vunpack.c.0.s8 %v868
        %v870 = vlaneseq
        %v871 = vshrl.u32 %v870, 7
        %v872 = vsub.s32 %v869, %v871
        %v873 = vrot.slane %v865, %v872
        %v875 = vunpack.c.l.s4 1983009808
        %v876 = vunpack.c.0.s8 %v875
        %v877 = vlaneseq
        %v878 = vshrl.u32 %v877, 7
        %v879 = vsub.s32 %v876, %v878
        %v880 = vrot.slane %v866, %v879
        %v881 = vcombine.low %v873, %v880
        %v882 = vcombine.low %v841, %v842
        %v883 = vcombine.low %v843, %v844
        %v885 = vunpack.c.l.s4 1983009808
        %v886 = vunpack.c.0.s8 %v885
        %v887 = vlaneseq
        %v888 = vshrl.u32 %v887, 7
        %v889 = vsub.s32 %v886, %v888
        %v890 = vrot.slane %v882, %v889
        %v892 = vunpack.c.l.s4 1983009808
        %v893 = vunpack.c.0.s8 %v892
        %v894 = vlaneseq
        %v895 = vshrl.u32 %v894, 7
        %v896 = vsub.s32 %v893, %v895
        %v897 = vrot.slane %v883, %v896
        %v898 = vcombine.low %v890, %v897
        %v899 = vcombine.low %v821, %v822
        %v900 = vcombine.low %v823, %v824
        %v902 = vunpack.c.l.s4 1983009808
        %v903 = vunpack.c.0.s8 %v902
        %v904 = vlaneseq
        %v905 = vshrl.u32 %v904, 7
        %v906 = vsub.s32 %v903, %v905
        %v907 = vrot.slane %v899, %v906
        %v909 = vunpack.c.l.s4 1983009808
        %v910 = vunpack.c.0.s8 %v909
        %v911 = vlaneseq
        %v912 = vshrl.u32 %v911, 7
        %v913 = vsub.s32 %v910, %v912
        %v914 = vrot.slane %v900, %v913
        %v915 = vcombine.low %v907, %v914
        %v916 = vcombine.low %v845, %v846
        %v917 = vcombine.low %v847, %v848
        %v919 = vunpack.c.l.s4 1983009808
        %v920 = vunpack.c.0.s8 %v919
        %v921 = vlaneseq
        %v922 = vshrl.u32 %v921, 7
        %v923 = vsub.s32 %v920, %v922
        %v924 = vrot.slane %v916, %v923
        %v926 = vunpack.c.l.s4 1983009808
        %v927 = vunpack.c.0.s8 %v926
        %v928 = vlaneseq
        %v929 = vshrl.u32 %v928, 7
        %v930 = vsub.s32 %v927, %v929
        %v931 = vrot.slane %v917, %v930
        %v932 = vcombine.low %v924, %v931
        %vm937 = vcmask 1041408
        %vm938 = vcmask 1043458
        %vm939 = vmor %vm938, %vm937
        %vm940 = vcmask 1045508
        %vm941 = vmor %vm940, %vm939
        %vm942 = vcmask 130054
        %vm943 = vmor %vm942, %vm941
        %944 = vst.msk [vmem:[%s203] sm:$0xff] %vm943, %v881
        %945 = vst.msk [vmem:[%s203 + $0x8] sm:$0xff] %vm943, %v898
        %946 = vst.msk [vmem:[%s203 + $0x10] sm:$0xff] %vm943, %v915
        %947 = vst.msk [vmem:[%s203 + $0x18] sm:$0xff] %vm943, %v932
        %s948 = sand.u32 %s82, 1
        %s949 = scalar_lea.sflag [#allocation4], %s948
        %s950 = sand.u32 %s82, 1
        %s951 = smul.addr %s950, 32
        %s952 = scalar_lea.vmem [#allocation7], %s951
        // Predicated region
        $region37: #{tpu_custom_call.1} parent=27 // pred_check
          %p953 = pneg %p92
        $region38: #{tpu_custom_call.1} parent=27 // pred_check_branch
          %955 = sbr.rel (%p953) target = $region40
        $region39: #{tpu_custom_call.1} parent=27 // pred_region
          %s956 = smul.u32 2, %s22
          %s958 = ssub.s32 512, 512
          %959 = vsyncadd %s949, %s958
          %s960 = smul.addr %s956, 8
          %s961 = smul.addr %s960, 32
          %s962 = scalar_lea.hbm %s2, %s961
          %s963 = sshll.u32 %s952, 4
          %s964 = int_to_ptr.vmem [resolvable:$true] %s963
          %969 = dma.vmem_to_hbm [thread:$0]  %s964, 512, %s962, %s949, 128, 128, 8
        $region40: #{tpu_custom_call.1} parent=27 // pred_fallthru
          _
      $region28: #{tpu_custom_call.1} parent=5 // pred_fallthru
        _
      %p970 = scmp.le.s32.totalorder 2, %s17
      // Predicated region
      $region41: #{tpu_custom_call.1} parent=5 // pred_check
        %p971 = pneg %p970
      $region42: #{tpu_custom_call.1} parent=5 // pred_check_branch
        %973 = sbr.rel (%p971) target = $region44
      $region43: #{tpu_custom_call.1} parent=5 // pred_region
        %s974 = ssub.s32 %s17, 2
        // Predicated region
        $region45: #{tpu_custom_call.1} parent=43 // pred_check
          %p975 = pneg %p98
        $region46: #{tpu_custom_call.1} parent=43 // pred_check_branch
          %977 = sbr.rel (%p975) target = $region48
        $region47: #{tpu_custom_call.1} parent=43 // pred_region
          %s978 = sand.u32 %s83, 1
          %s979 = scalar_lea.sflag [#allocation4], %s978
          %s980 = sand.u32 %s83, 1
          %s981 = smul.addr %s980, 32
          %s982 = scalar_lea.vmem [#allocation7], %s981
          %983 = dma.done %s979, 512
        $region48: #{tpu_custom_call.1} parent=43 // pred_fallthru
          _
      $region44: #{tpu_custom_call.1} parent=5 // pred_fallthru
        _
    $region6: #{tpu_custom_call.1} parent=1 // loop_footer
      %s21 = sadd.s32 1, %s17
    $region7: #{tpu_custom_call.1} parent=1 // loop_footer_branch
      %16 = sbr.rel target = $region3
    $region8: #{tpu_custom_call.1} parent=1 // loop_exit
      _
    %984 = vsyncpa [#allocation3], 1
    %s985 = scalar_lea.sflag [#allocation3], 1
    %986 = vsyncpa %s985, 1
    %987 = vsyncpa [#allocation6], 1
    %s988 = scalar_lea.sflag [#allocation6], 1
    %989 = vsyncpa %s988, 1
    %990 = vsyncpa [#allocation4], 1
    %s991 = scalar_lea.sflag [#allocation4], 1
    %992 = vsyncpa %s991, 1

</llo_original>
